<compile_context>
chip_gen: v6e
topology: v6e:2x2x1
jax: 0.10.0
libtpu: 0.0.40
codegen_flags: <defaults>
</compile_context>

<pallas_src>
import functools

import numpy as np
import jax
import jax.numpy as jnp
from jax.experimental import pallas as pl
from jax.experimental.pallas import tpu as pltpu


def _round_up(x, m):
    return ((x + m - 1) // m) * m


def _leaky_relu(x, slope):
    return jnp.where(x >= 0, x, slope * x)


def _vmem_capacity_bytes():
    """Physical VMEM per TensorCore; conservative 64 MiB (v7x floor) fallback."""
    try:
        return int(pltpu.get_tpu_info().vmem_capacity_bytes)
    except Exception:
        return 64 * 1024 * 1024


def generator_kernel(x_ref,
                     w1_ref, b1_ref,
                     w2_ref, b2_ref,
                     w3_ref, b3_ref,
                     w4_ref, b4_ref, s4_ref,
                     o_ref):
    """One (out-tile j, batch-tile i) grid step of the fused 4-layer generator MLP.

    Layers 1-3 are recomputed per step (cheap; keeps the grid fully parallel).
    Layer 4 uses the VMEM-resident w4 N-tile; an optional per-column scale
    (ones when w4 is not quantized) is applied in the f32 epilogue.
    """
    cdt = w1_ref.dtype  # MXU operand dtype (f32 or bf16); accumulation is f32.

    x = x_ref[...].astype(cdt)
    # Layer 1: Linear(nz, 128) + LeakyReLU(0.1)
    h = jnp.dot(x, w1_ref[...], preferred_element_type=jnp.float32)
    h = _leaky_relu(h + b1_ref[...].astype(jnp.float32), 0.1)
    # Layer 2: Linear(128, 256) + LeakyReLU(0.01)
    h = jnp.dot(h.astype(cdt), w2_ref[...], preferred_element_type=jnp.float32)
    h = _leaky_relu(h + b2_ref[...].astype(jnp.float32), 0.01)
    # Layer 3: Linear(256, 512) + LeakyReLU(0.01)
    h = jnp.dot(h.astype(cdt), w3_ref[...], preferred_element_type=jnp.float32)
    h = _leaky_relu(h + b3_ref[...].astype(jnp.float32), 0.01)
    # Layer 4 (N-tiled): Linear(512, tn), no activation.  w4 may be a narrow
    # dtype (bf16 / int8 / fp8); dequant happens in VMEM, the scale in the
    # epilogue, so only the narrow bytes cross HBM.
    w4 = w4_ref[...].astype(cdt)
    out = jnp.dot(h.astype(cdt), w4, preferred_element_type=jnp.float32)
    out = out * s4_ref[...].astype(jnp.float32) + b4_ref[...].astype(jnp.float32)
    o_ref[...] = out.astype(o_ref.dtype)


def prepare_params(params):
    """One-time (outside-jit) prep: pad the layer-4 operands' last dim to a
    multiple of 128 and guarantee a per-column scale row.  Hoisting this out of
    the hot path avoids re-materializing a full copy of w4 every forward call."""
    p = dict(params)
    out_dim = p["w4"].shape[1]
    out_dim_p = _round_up(out_dim, 128)
    pad = out_dim_p - out_dim
    if "w4_scale" not in p:
        p["w4_scale"] = jnp.ones((1, out_dim), jnp.float32)
    if pad:
        p["w4"] = jnp.pad(p["w4"], ((0, 0), (0, pad)))
        p["b4"] = jnp.pad(p["b4"], ((0, 0), (0, pad)))
        p["w4_scale"] = jnp.pad(p["w4_scale"], ((0, 0), (0, pad)),
                                constant_values=1.0)
    return p


def quantize_w4_int8(params):
    """Per-output-column absmax int8 quantization of w4 (halves the dominant
    HBM stream vs bf16; native int8 is a v5e/v6e fit).
    # TODO(synk): on v7x use float8_e4m3fn instead of int8 (v7x MXU has no int
    # path); the same per-column-scale epilogue in the kernel applies unchanged.
    """
    w4 = params["w4"].astype(jnp.float32)
    scale = jnp.maximum(jnp.max(jnp.abs(w4), axis=0, keepdims=True) / 127.0, 1e-12)
    q = jnp.clip(jnp.round(w4 / scale), -127, 127).astype(jnp.int8)
    out = dict(params)
    out["w4"] = q
    out["w4_scale"] = scale.astype(jnp.float32)
    return out


@functools.partial(jax.jit,
                   static_argnames=("img_size", "block_b", "block_n", "out_dtype"))
def generator_forward(x, params, img_size, *, block_b=None, block_n=None,
                      out_dtype=jnp.float32):
    """x: (B, nz).  params: output of prepare_params() — (in,out) weights
    'w1'..'w4' (w4 lane-padded, optionally narrow dtype), (1,out) f32 biases,
    and a (1, out_padded) f32 'w4_scale' row."""
    B, nz = x.shape
    out_dim = int(np.prod(img_size))

    if "w4_scale" not in params:
        raise ValueError("params must be passed through prepare_params() first")
    w4, b4, s4 = params["w4"], params["b4"], params["w4_scale"]
    out_dim_p = w4.shape[1]
    assert out_dim_p % 128 == 0 and out_dim_p >= out_dim, (
        "w4 must be lane-padded by prepare_params()")

    # ---- hardware-aware defaults: big tiles / big scoped VMEM on 128-MiB parts
    #      (v5e/v6e), conservative on v7x's 64 MiB per TensorCore. ----
    vmem_cap = _vmem_capacity_bytes()
    big_vmem = vmem_cap >= 100 * 1024 * 1024
    if block_b is None:
        block_b = 512 if big_vmem else 256
    if block_n is None:
        block_n = 4096 if big_vmem else 2048
    block_n = max(int(block_n), 128)
    vmem_limit = int(min((vmem_cap * 3) // 4, 100 * 1024 * 1024))

    # ---- layer-4 N tile: largest multiple of 128 that divides the (already
    #      128-padded) out dim and fits block_n -> padding never exceeds 127. ----
    m = out_dim_p // 128
    d = max(dd for dd in range(1, m + 1) if m % dd == 0 and 128 * dd <= block_n)
    tn = 128 * d

    # ---- adaptive batch tile: shrink tb until padding waste <= ~25% of B. ----
    tb = min(block_b, _round_up(B, 8))
    while tb > 8 and 4 * (_round_up(B, tb) - B) > B:
        tb = _round_up(tb // 2, 8)
    b_pad = _round_up(B, tb)
    if b_pad != B:
        x = jnp.pad(x, ((0, b_pad - B), (0, 0)))

    # Grid: out-tiles OUTER, batch-tiles INNER -> w4/b4/scale block indices are
    # invariant over the inner axis, so Pallas keeps them VMEM-resident and w4
    # is read from HBM exactly once per forward.  Both axes are independent
    # (layers 1-3 recomputed per step) -> both "parallel" for megacore.
    grid = (out_dim_p // tn, b_pad // tb)

    grid_spec = pltpu.PrefetchScalarGridSpec(
        num_scalar_prefetch=0,
        grid=grid,
        in_specs=[
            pl.BlockSpec((tb, nz), lambda j, i: (i, 0)),      # x batch tile (tiny)
            pl.BlockSpec((nz, 128), lambda j, i: (0, 0)),     # w1 (VMEM-resident)
            pl.BlockSpec((1, 128), lambda j, i: (0, 0)),      # b1
            pl.BlockSpec((128, 256), lambda j, i: (0, 0)),    # w2
            pl.BlockSpec((1, 256), lambda j, i: (0, 0)),      # b2
            pl.BlockSpec((256, 512), lambda j, i: (0, 0)),    # w3
            pl.BlockSpec((1, 512), lambda j, i: (0, 0)),      # b3
            pl.BlockSpec((512, tn), lambda j, i: (0, j)),     # w4 N-tile (outer-only)
            pl.BlockSpec((1, tn), lambda j, i: (0, j)),       # b4 N-tile
            pl.BlockSpec((1, tn), lambda j, i: (0, j)),       # w4 per-column scale
        ],
        out_specs=pl.BlockSpec((tb, tn), lambda j, i: (i, j)),
    )

    flat = pl.pallas_call(
        generator_kernel,
        out_shape=jax.ShapeDtypeStruct((b_pad, out_dim_p), out_dtype),
        grid_spec=grid_spec,
        compiler_params=pltpu.CompilerParams(
            dimension_semantics=("parallel", "parallel"),
            vmem_limit_bytes=vmem_limit,
        ),
    )(x,
      params["w1"], params["b1"],
      params["w2"], params["b2"],
      params["w3"], params["b3"],
      w4, b4, s4)

    # img.view(B, *img_size): drop batch / lane padding, then NCHW reshape.
    return flat[:B, :out_dim].reshape((B,) + img_size)


def init_params(key, nz, img_size, dtype=jnp.float32):
    """Synthetic init matching nn.Linear shapes; weights pre-transposed to (in,out)."""
    dims = [nz, 128, 256, 512, int(np.prod(img_size))]
    params = {}
    for i in range(4):
        fan_in, fan_out = dims[i], dims[i + 1]
        key, kw, kb = jax.random.split(key, 3)
        bound = 1.0 / float(np.sqrt(fan_in))
        params[f"w{i+1}"] = jax.random.uniform(
            kw, (fan_in, fan_out), jnp.float32, -bound, bound).astype(dtype)
        params[f"b{i+1}"] = jax.random.uniform(
            kb, (1, fan_out), jnp.float32, -bound, bound)   # biases stay f32
    return params


def reference_forward(x, params, img_size):
    """Pure-JAX f32 reference (matches the PyTorch module)."""
    w = {k: v.astype(jnp.float32) for k, v in params.items()}
    h = x @ w["w1"] + w["b1"]
    h = jnp.where(h >= 0, h, 0.1 * h)
    h = h @ w["w2"] + w["b2"]
    h = jnp.where(h >= 0, h, 0.01 * h)
    h = h @ w["w3"] + w["b3"]
    h = jnp.where(h >= 0, h, 0.01 * h)
    h = h @ w["w4"] + w["b4"]
    return h.reshape((x.shape[0],) + img_size)


if __name__ == "__main__":
    key = jax.random.PRNGKey(0)
    nz = 16
    img_size = (1, 8, 8)          # prod = 64 (lane-padded to 128 internally)
    batch = 8

    key, kx, kp = jax.random.split(key, 3)
    x = jax.random.normal(kx, (batch, nz), jnp.float32)    # noise like get_noise()
    params = init_params(kp, nz, img_size)
    ref = reference_forward(x, params, img_size)

    # f32 path: exact-semantics check.
    prepared_f32 = prepare_params(params)                  # pad hoisted, runs once
    out = jax.block_until_ready(generator_forward(x, prepared_f32, img_size))
    assert out.shape == (batch,) + img_size, out.shape
    assert jnp.allclose(out, ref, atol=1e-5, rtol=1e-5), "f32 mismatch vs reference"

    # bf16 weights + bf16 output (MXU-native operands, f32 accumulation).
    params_bf16 = {k: (v.astype(jnp.bfloat16) if k.startswith("w") else v)
                   for k, v in params.items()}
    prepared_bf16 = prepare_params(params_bf16)
    out_bf16 = jax.block_until_ready(
        generator_forward(x, prepared_bf16, img_size, out_dtype=jnp.bfloat16))
    assert jnp.allclose(out_bf16.astype(jnp.float32), ref,
                        atol=1e-1, rtol=1e-1), "bf16 mismatch vs reference"

    # int8 w4 with per-column scale (halves the dominant HBM stream).
    prepared_i8 = prepare_params(quantize_w4_int8(params))
    out_i8 = jax.block_until_ready(generator_forward(x, prepared_i8, img_size))
    assert jnp.allclose(out_i8, ref, atol=2e-2, rtol=2e-1), "int8 mismatch vs reference"

    print("KERNEL_OK")
</pallas_src>

<mosaic_0001>
module attributes {stable_mosaic.version = 11 : i64} {
  func.func @generator_kernel(%arg0: i32, %arg1: i32, %arg2: memref<8x16xf32, #tpu.memory_space<vmem>>, %arg3: memref<16x128xf32, #tpu.memory_space<vmem>>, %arg4: memref<1x128xf32, #tpu.memory_space<vmem>>, %arg5: memref<128x256xf32, #tpu.memory_space<vmem>>, %arg6: memref<1x256xf32, #tpu.memory_space<vmem>>, %arg7: memref<256x512xf32, #tpu.memory_space<vmem>>, %arg8: memref<1x512xf32, #tpu.memory_space<vmem>>, %arg9: memref<512x128xf32, #tpu.memory_space<vmem>>, %arg10: memref<1x128xf32, #tpu.memory_space<vmem>>, %arg11: memref<1x128xf32, #tpu.memory_space<vmem>>, %arg12: memref<8x128xf32, #tpu.memory_space<vmem>>) attributes {dimension_semantics = [#tpu.dimension_semantics<parallel>, #tpu.dimension_semantics<parallel>], iteration_bounds = array<i64: 1, 1>, scalar_prefetch = 0 : i64, scratch_operands = 0 : i64, tpu.core_type = #tpu.core_type<tc>, window_params = [{transform_indices = @transform_0, window_bounds = array<i64: 8, 16>}, {pipeline_mode = #tpu.pipeline_mode<synchronous>, transform_indices = @transform_1, window_bounds = array<i64: 16, 128>}, {pipeline_mode = #tpu.pipeline_mode<synchronous>, transform_indices = @transform_2, window_bounds = array<i64: 1, 128>}, {pipeline_mode = #tpu.pipeline_mode<synchronous>, transform_indices = @transform_3, window_bounds = array<i64: 128, 256>}, {pipeline_mode = #tpu.pipeline_mode<synchronous>, transform_indices = @transform_4, window_bounds = array<i64: 1, 256>}, {pipeline_mode = #tpu.pipeline_mode<synchronous>, transform_indices = @transform_5, window_bounds = array<i64: 256, 512>}, {pipeline_mode = #tpu.pipeline_mode<synchronous>, transform_indices = @transform_6, window_bounds = array<i64: 1, 512>}, {transform_indices = @transform_7, window_bounds = array<i64: 512, 128>}, {transform_indices = @transform_8, window_bounds = array<i64: 1, 128>}, {transform_indices = @transform_9, window_bounds = array<i64: 1, 128>}, {transform_indices = @transform_10, window_bounds = array<i64: 8, 128>}]} {
    %c0 = arith.constant 0 : index
    %c0_0 = arith.constant 0 : index
    %0 = vector.load %arg2[%c0, %c0_0] : memref<8x16xf32, #tpu.memory_space<vmem>>, vector<8x16xf32>
    %c0_1 = arith.constant 0 : index
    %c0_2 = arith.constant 0 : index
    %1 = vector.load %arg3[%c0_1, %c0_2] : memref<16x128xf32, #tpu.memory_space<vmem>>, vector<16x128xf32>
    %cst = arith.constant dense<0.000000e+00> : vector<8x128xf32>
    %2 = tpu.matmul %0, %1, %cst {dimension_numbers = #tpu.dot_dimension_numbers<[1], [0], [0], [1], [0, 0, 1, 1], [], []>} : vector<8x16xf32>, vector<16x128xf32>, vector<8x128xf32> -> vector<8x128xf32>
    %c0_3 = arith.constant 0 : index
    %c0_4 = arith.constant 0 : index
    %3 = vector.load %arg4[%c0_3, %c0_4] : memref<1x128xf32, #tpu.memory_space<vmem>>, vector<1x128xf32>
    %4 = vector.broadcast %3 : vector<1x128xf32> to vector<8x128xf32>
    %5 = arith.addf %2, %4 : vector<8x128xf32>
    %cst_5 = arith.constant 0.000000e+00 : f32
    %6 = vector.broadcast %cst_5 : f32 to vector<8x128xf32>
    %7 = arith.cmpf oge, %5, %6 : vector<8x128xf32>
    %cst_6 = arith.constant 1.000000e-01 : f32
    %8 = vector.broadcast %cst_6 : f32 to vector<8x128xf32>
    %9 = arith.mulf %8, %5 : vector<8x128xf32>
    %10 = arith.select %7, %5, %9 : vector<8x128xi1>, vector<8x128xf32>
    %c0_7 = arith.constant 0 : index
    %c0_8 = arith.constant 0 : index
    %11 = vector.load %arg5[%c0_7, %c0_8] : memref<128x256xf32, #tpu.memory_space<vmem>>, vector<128x256xf32>
    %cst_9 = arith.constant dense<0.000000e+00> : vector<8x256xf32>
    %12 = tpu.matmul %10, %11, %cst_9 {dimension_numbers = #tpu.dot_dimension_numbers<[1], [0], [0], [1], [0, 0, 1, 1], [], []>} : vector<8x128xf32>, vector<128x256xf32>, vector<8x256xf32> -> vector<8x256xf32>
    %c0_10 = arith.constant 0 : index
    %c0_11 = arith.constant 0 : index
    %13 = vector.load %arg6[%c0_10, %c0_11] : memref<1x256xf32, #tpu.memory_space<vmem>>, vector<1x256xf32>
    %14 = vector.broadcast %13 : vector<1x256xf32> to vector<8x256xf32>
    %15 = arith.addf %12, %14 : vector<8x256xf32>
    %cst_12 = arith.constant 0.000000e+00 : f32
    %16 = vector.broadcast %cst_12 : f32 to vector<8x256xf32>
    %17 = arith.cmpf oge, %15, %16 : vector<8x256xf32>
    %cst_13 = arith.constant 0.00999999977 : f32
    %18 = vector.broadcast %cst_13 : f32 to vector<8x256xf32>
    %19 = arith.mulf %18, %15 : vector<8x256xf32>
    %20 = arith.select %17, %15, %19 : vector<8x256xi1>, vector<8x256xf32>
    %c0_14 = arith.constant 0 : index
    %c0_15 = arith.constant 0 : index
    %21 = vector.load %arg7[%c0_14, %c0_15] : memref<256x512xf32, #tpu.memory_space<vmem>>, vector<256x512xf32>
    %cst_16 = arith.constant dense<0.000000e+00> : vector<8x512xf32>
    %22 = tpu.matmul %20, %21, %cst_16 {dimension_numbers = #tpu.dot_dimension_numbers<[1], [0], [0], [1], [0, 0, 1, 1], [], []>} : vector<8x256xf32>, vector<256x512xf32>, vector<8x512xf32> -> vector<8x512xf32>
    %c0_17 = arith.constant 0 : index
    %c0_18 = arith.constant 0 : index
    %23 = vector.load %arg8[%c0_17, %c0_18] : memref<1x512xf32, #tpu.memory_space<vmem>>, vector<1x512xf32>
    %24 = vector.broadcast %23 : vector<1x512xf32> to vector<8x512xf32>
    %25 = arith.addf %22, %24 : vector<8x512xf32>
    %cst_19 = arith.constant 0.000000e+00 : f32
    %26 = vector.broadcast %cst_19 : f32 to vector<8x512xf32>
    %27 = arith.cmpf oge, %25, %26 : vector<8x512xf32>
    %cst_20 = arith.constant 0.00999999977 : f32
    %28 = vector.broadcast %cst_20 : f32 to vector<8x512xf32>
    %29 = arith.mulf %28, %25 : vector<8x512xf32>
    %30 = arith.select %27, %25, %29 : vector<8x512xi1>, vector<8x512xf32>
    %c0_21 = arith.constant 0 : index
    %c0_22 = arith.constant 0 : index
    %31 = vector.load %arg9[%c0_21, %c0_22] : memref<512x128xf32, #tpu.memory_space<vmem>>, vector<512x128xf32>
    %cst_23 = arith.constant dense<0.000000e+00> : vector<8x128xf32>
    %32 = tpu.matmul %30, %31, %cst_23 {dimension_numbers = #tpu.dot_dimension_numbers<[1], [0], [0], [1], [0, 0, 1, 1], [], []>} : vector<8x512xf32>, vector<512x128xf32>, vector<8x128xf32> -> vector<8x128xf32>
    %c0_24 = arith.constant 0 : index
    %c0_25 = arith.constant 0 : index
    %33 = vector.load %arg11[%c0_24, %c0_25] : memref<1x128xf32, #tpu.memory_space<vmem>>, vector<1x128xf32>
    %34 = vector.broadcast %33 : vector<1x128xf32> to vector<8x128xf32>
    %35 = arith.mulf %32, %34 : vector<8x128xf32>
    %c0_26 = arith.constant 0 : index
    %c0_27 = arith.constant 0 : index
    %36 = vector.load %arg10[%c0_26, %c0_27] : memref<1x128xf32, #tpu.memory_space<vmem>>, vector<1x128xf32>
    %37 = vector.broadcast %36 : vector<1x128xf32> to vector<8x128xf32>
    %38 = arith.addf %35, %37 : vector<8x128xf32>
    %c0_28 = arith.constant 0 : index
    %c0_29 = arith.constant 0 : index
    %39 = vector.load %arg12[%c0_28, %c0_29] : memref<8x128xf32, #tpu.memory_space<vmem>>, vector<8x128xf32>
    tpu.vector_store %arg12[%c0_28, %c0_29], %38 {strides = array<i32>} : memref<8x128xf32, #tpu.memory_space<vmem>>, vector<8x128xf32>,
    return
  }
  func.func @transform_0(%arg0: i32, %arg1: i32) -> (i32, i32) {
    %c0_i32 = arith.constant 0 : i32
    %c0_i32_0 = arith.constant 0 : i32
    return %arg1, %c0_i32 : i32, i32
  }
  func.func @transform_1(%arg0: i32, %arg1: i32) -> (i32, i32) {
    %c0_i32 = arith.constant 0 : i32
    %c0_i32_0 = arith.constant 0 : i32
    %c0_i32_1 = arith.constant 0 : i32
    return %c0_i32, %c0_i32_0 : i32, i32
  }
  func.func @transform_2(%arg0: i32, %arg1: i32) -> (i32, i32) {
    %c0_i32 = arith.constant 0 : i32
    %c0_i32_0 = arith.constant 0 : i32
    %c0_i32_1 = arith.constant 0 : i32
    return %c0_i32, %c0_i32_0 : i32, i32
  }
  func.func @transform_3(%arg0: i32, %arg1: i32) -> (i32, i32) {
    %c0_i32 = arith.constant 0 : i32
    %c0_i32_0 = arith.constant 0 : i32
    %c0_i32_1 = arith.constant 0 : i32
    return %c0_i32, %c0_i32_0 : i32, i32
  }
  func.func @transform_4(%arg0: i32, %arg1: i32) -> (i32, i32) {
    %c0_i32 = arith.constant 0 : i32
    %c0_i32_0 = arith.constant 0 : i32
    %c0_i32_1 = arith.constant 0 : i32
    return %c0_i32, %c0_i32_0 : i32, i32
  }
  func.func @transform_5(%arg0: i32, %arg1: i32) -> (i32, i32) {
    %c0_i32 = arith.constant 0 : i32
    %c0_i32_0 = arith.constant 0 : i32
    %c0_i32_1 = arith.constant 0 : i32
    return %c0_i32, %c0_i32_0 : i32, i32
  }
  func.func @transform_6(%arg0: i32, %arg1: i32) -> (i32, i32) {
    %c0_i32 = arith.constant 0 : i32
    %c0_i32_0 = arith.constant 0 : i32
    %c0_i32_1 = arith.constant 0 : i32
    return %c0_i32, %c0_i32_0 : i32, i32
  }
  func.func @transform_7(%arg0: i32, %arg1: i32) -> (i32, i32) {
    %c0_i32 = arith.constant 0 : i32
    %c0_i32_0 = arith.constant 0 : i32
    return %c0_i32, %arg0 : i32, i32
  }
  func.func @transform_8(%arg0: i32, %arg1: i32) -> (i32, i32) {
    %c0_i32 = arith.constant 0 : i32
    %c0_i32_0 = arith.constant 0 : i32
    return %c0_i32, %arg0 : i32, i32
  }
  func.func @transform_9(%arg0: i32, %arg1: i32) -> (i32, i32) {
    %c0_i32 = arith.constant 0 : i32
    %c0_i32_0 = arith.constant 0 : i32
    return %c0_i32, %arg0 : i32, i32
  }
  func.func @transform_10(%arg0: i32, %arg1: i32) -> (i32, i32) {
    %c0_i32 = arith.constant 0 : i32
    return %arg1, %arg0 : i32, i32
  }
}

</mosaic_0001>

<llo_original>
// kernel: generator_forward.1
$region0: #{generator_forward.1}
  #allocation0 [shape = 'u32[]', space=smem, size = 0x4, offset = 0x4, fixed_abs, tag = 'smem constant byte address 0x4 - core index']
  #allocation1 [shape = 'u32[144,128]{1,0:T(1,128)}', space=vmem, size = 0x12000, scoped, tag = 'internal scratch']
  %s0 = inlined_call_operand.hbm [shape: f32[8,16], index: 0, kind: input, shape index: {}]
  %s1 = inlined_call_operand.hbm [shape: f32[16,128], index: 1, kind: input, shape index: {}]
  %s2 = inlined_call_operand.vmem [shape: f32[1,128], index: 2, kind: input, shape index: {}]
  %s3 = inlined_call_operand.hbm [shape: f32[128,256], index: 3, kind: input, shape index: {}]
  %s4 = inlined_call_operand.hbm [shape: f32[1,256], index: 4, kind: input, shape index: {}]
  %s5 = inlined_call_operand.hbm [shape: f32[256,512], index: 5, kind: input, shape index: {}]
  %s6 = inlined_call_operand.vmem [shape: f32[1,512], index: 6, kind: input, shape index: {}]
  %s7 = inlined_call_operand.hbm [shape: f32[512,128], index: 7, kind: input, shape index: {}]
  %s8 = inlined_call_operand.vmem [shape: f32[1,128], index: 8, kind: input, shape index: {}]
  %s9 = inlined_call_operand.vmem [shape: f32[1,128], index: 9, kind: input, shape index: {}]
  %s10 = inlined_call_operand.vmem [shape: f32[8,128], index: 10, kind: output, shape index: {}]
  %s11 = sld [smem:[#allocation0]]
  $region74: #{generator_forward.1} parent=0
    _
  %s13 = ssub.s32 1, %s11
  %s14 = scalar_select 0, %s13, %s11
  $region1: #{generator_forward.1} parent=0
    #allocation2 [shape = 'u8[4096]{0}', space=vmem, size = 0x1000, scoped, tag = 'input window, operand 0, single buffered']
    #allocation3 [shape = 's32[1]{0}', space=sflag, size = 0x4, scoped, tag = 'scoped memory for generator_forward.1']
    #allocation4 [shape = 'u8[8192]{0}', space=vmem, size = 0x2000, scoped, tag = 'input window, operand 1, single buffered']
    #allocation5 [shape = 's32[1]{0}', space=sflag, size = 0x4, scoped, tag = 'scoped memory for generator_forward.1']
    #allocation6 [shape = 'u8[131072]{0}', space=vmem, size = 0x20000, scoped, tag = 'input window, operand 3, single buffered']
    #allocation7 [shape = 'u8[1024]{0}', space=vmem, size = 0x400, scoped, tag = 'input window, operand 4, single buffered']
    #allocation8 [shape = 's32[1]{0}', space=sflag, size = 0x4, scoped, tag = 'scoped memory for generator_forward.1']
    #allocation9 [shape = 'u8[524288]{0}', space=vmem, size = 0x80000, scoped, tag = 'input window, operand 5, single buffered']
    #allocation10 [shape = 'u8[262144]{0}', space=vmem, size = 0x40000, scoped, tag = 'input window, operand 7, single buffered']
    #allocation11 [shape = 's32[1]{0}', space=sflag, size = 0x4, scoped, tag = 'scoped memory for generator_forward.1']
    %15 = vsyncpa [#allocation3], 0
    %16 = vsyncpa [#allocation5], 0
    %17 = vsyncpa [#allocation8], 0
    %18 = vsyncpa [#allocation11], 0
    // Predicated region
    $region2: #{generator_forward.1} parent=1 // pred_check
      _
    $region3: #{generator_forward.1} parent=1 // pred_check_branch
      %20 = sbr.rel (0) target = $region5
    $region4: #{generator_forward.1} parent=1 // pred_region
      %s22 = ssub.s32 128, 128
      %23 = vsyncadd [#allocation3], %s22
      %s25 = sshll.u32 [#allocation2], 4
      %s26 = int_to_ptr.vmem [resolvable:$true] %s25
      %28 = dma.hbm_to_vmem [thread:$0]  %s0, 128, %s26, [#allocation3]
    $region5: #{generator_forward.1} parent=1 // pred_fallthru
      _
    // Predicated region
    $region6: #{generator_forward.1} parent=1 // pred_check
      _
    $region7: #{generator_forward.1} parent=1 // pred_check_branch
      %30 = sbr.rel (0) target = $region9
    $region8: #{generator_forward.1} parent=1 // pred_region
      %s32 = ssub.s32 256, 256
      %33 = vsyncadd [#allocation5], %s32
      %s34 = sshll.u32 [#allocation4], 4
      %s35 = int_to_ptr.vmem [resolvable:$true] %s34
      %40 = dma.hbm_to_vmem [thread:$0]  %s1, 256, %s35, [#allocation5], 128, 128, 8
    $region9: #{generator_forward.1} parent=1 // pred_fallthru
      _
    // Predicated region
    $region10: #{generator_forward.1} parent=1 // pred_check
      _
    $region11: #{generator_forward.1} parent=1 // pred_check_branch
      %42 = sbr.rel (0) target = $region13
    $region12: #{generator_forward.1} parent=1 // pred_region
      _
    $region13: #{generator_forward.1} parent=1 // pred_fallthru
      _
    // Predicated region
    $region14: #{generator_forward.1} parent=1 // pred_check
      _
    $region15: #{generator_forward.1} parent=1 // pred_check_branch
      %44 = sbr.rel (0) target = $region17
    $region16: #{generator_forward.1} parent=1 // pred_region
      %s46 = ssub.s32 4096, 4096
      %47 = vsyncadd [#allocation5], %s46
      %s48 = sshll.u32 [#allocation6], 4
      %s49 = int_to_ptr.vmem [resolvable:$true] %s48
      %54 = dma.hbm_to_vmem [thread:$0]  %s3, 4096, %s49, [#allocation5], 256, 256, 16
    $region17: #{generator_forward.1} parent=1 // pred_fallthru
      _
    // Predicated region
    $region18: #{generator_forward.1} parent=1 // pred_check
      _
    $region19: #{generator_forward.1} parent=1 // pred_check_branch
      %56 = sbr.rel (0) target = $region21
    $region20: #{generator_forward.1} parent=1 // pred_region
      %s58 = ssub.s32 32, 32
      %59 = vsyncadd [#allocation8], %s58
      %s61 = sshll.u32 [#allocation7], 4
      %s62 = int_to_ptr.vmem [resolvable:$true] %s61
      %64 = dma.hbm_to_vmem [thread:$0]  %s4, 32, %s62, [#allocation8]
    $region21: #{generator_forward.1} parent=1 // pred_fallthru
      _
    // Predicated region
    $region22: #{generator_forward.1} parent=1 // pred_check
      _
    $region23: #{generator_forward.1} parent=1 // pred_check_branch
      %66 = sbr.rel (0) target = $region25
    $region24: #{generator_forward.1} parent=1 // pred_region
      %s68 = ssub.s32 16384, 16384
      %69 = vsyncadd [#allocation8], %s68
      %s70 = sshll.u32 [#allocation9], 4
      %s71 = int_to_ptr.vmem [resolvable:$true] %s70
      %76 = dma.hbm_to_vmem [thread:$0]  %s5, 16384, %s71, [#allocation8], 512, 512, 32
    $region25: #{generator_forward.1} parent=1 // pred_fallthru
      _
    // Predicated region
    $region26: #{generator_forward.1} parent=1 // pred_check
      _
    $region27: #{generator_forward.1} parent=1 // pred_check_branch
      %78 = sbr.rel (0) target = $region29
    $region28: #{generator_forward.1} parent=1 // pred_region
      _
    $region29: #{generator_forward.1} parent=1 // pred_fallthru
      _
    // Predicated region
    $region30: #{generator_forward.1} parent=1 // pred_check
      _
    $region31: #{generator_forward.1} parent=1 // pred_check_branch
      %80 = sbr.rel (0) target = $region33
    $region32: #{generator_forward.1} parent=1 // pred_region
      %s82 = ssub.s32 8192, 8192
      %83 = vsyncadd [#allocation11], %s82
      %s84 = sshll.u32 [#allocation10], 4
      %s85 = int_to_ptr.vmem [resolvable:$true] %s84
      %90 = dma.hbm_to_vmem [thread:$0]  %s7, 8192, %s85, [#allocation11], 128, 128, 8
    $region33: #{generator_forward.1} parent=1 // pred_fallthru
      _
    // Predicated region
    $region34: #{generator_forward.1} parent=1 // pred_check
      _
    $region35: #{generator_forward.1} parent=1 // pred_check_branch
      %92 = sbr.rel (0) target = $region37
    $region36: #{generator_forward.1} parent=1 // pred_region
      _
    $region37: #{generator_forward.1} parent=1 // pred_fallthru
      _
    // Predicated region
    $region38: #{generator_forward.1} parent=1 // pred_check
      _
    $region39: #{generator_forward.1} parent=1 // pred_check_branch
      %94 = sbr.rel (0) target = $region41
    $region40: #{generator_forward.1} parent=1 // pred_region
      _
    $region41: #{generator_forward.1} parent=1 // pred_fallthru
      _
    // Predicated region
    $region42: #{generator_forward.1} parent=1 // pred_check
      _
    $region43: #{generator_forward.1} parent=1 // pred_check_branch
      %96 = sbr.rel (0) target = $region45
    $region44: #{generator_forward.1} parent=1 // pred_region
      %97 = dma.done [#allocation3], 128
    $region45: #{generator_forward.1} parent=1 // pred_fallthru
      _
    // Predicated region
    $region46: #{generator_forward.1} parent=1 // pred_check
      _
    $region47: #{generator_forward.1} parent=1 // pred_check_branch
      %99 = sbr.rel (0) target = $region49
    $region48: #{generator_forward.1} parent=1 // pred_region
      %100 = dma.done [#allocation5], 256
    $region49: #{generator_forward.1} parent=1 // pred_fallthru
      _
    // Predicated region
    $region50: #{generator_forward.1} parent=1 // pred_check
      _
    $region51: #{generator_forward.1} parent=1 // pred_check_branch
      %102 = sbr.rel (0) target = $region53
    $region52: #{generator_forward.1} parent=1 // pred_region
      %103 = dma.done [#allocation5], 4096
    $region53: #{generator_forward.1} parent=1 // pred_fallthru
      _
    // Predicated region
    $region54: #{generator_forward.1} parent=1 // pred_check
      _
    $region55: #{generator_forward.1} parent=1 // pred_check_branch
      %105 = sbr.rel (0) target = $region57
    $region56: #{generator_forward.1} parent=1 // pred_region
      %106 = dma.done [#allocation8], 32
    $region57: #{generator_forward.1} parent=1 // pred_fallthru
      _
    // Predicated region
    $region58: #{generator_forward.1} parent=1 // pred_check
      _
    $region59: #{generator_forward.1} parent=1 // pred_check_branch
      %108 = sbr.rel (0) target = $region61
    $region60: #{generator_forward.1} parent=1 // pred_region
      %109 = dma.done [#allocation8], 16384
    $region61: #{generator_forward.1} parent=1 // pred_fallthru
      _
    // Predicated region
    $region62: #{generator_forward.1} parent=1 // pred_check
      _
    $region63: #{generator_forward.1} parent=1 // pred_check_branch
      %111 = sbr.rel (0) target = $region65
    $region64: #{generator_forward.1} parent=1 // pred_region
      %112 = dma.done [#allocation11], 8192
    $region65: #{generator_forward.1} parent=1 // pred_fallthru
      _
    %v113 = vld [vmem:[#allocation2] sm:$0xff]
    %v114 = vld [vmem:[#allocation4] sm:$0xff]
    %v115 = vld [vmem:[#allocation4 + $0x8] sm:$0xff]
    %v116 = vld [vmem:[%s2] sm:$0x1]
    %v118 = vlaneseq
    %v119 = vshrl.u32 %v118, 7
    %v120 = vsub.s32 0, %v119
    %v121 = vrot.slane %v116, %v120
    %vm123 = vcmask 130048
    %v125 = vsel %vm123, %v113, 0
    %127 = vmatprep.subr.mxu0 0.0
    %128 = vmatpush1.msra.mxu0 0.0
    %129 = vmatprep.subr.mxu0 0.0
    %130 = vmatpush1.msra.mxu0 0.0
    %131 = vmatprep.subr.mxu0 0.0
    %132 = vmatpush1.msra.mxu0 0.0
    %133 = vmatprep.subr.mxu0 0.0
    %134 = vmatpush1.msra.mxu0 0.0
    %135 = vmatprep.subr.mxu0 0.0
    %136 = vmatpush1.msra.mxu0 0.0
    %137 = vmatprep.subr.mxu0 0.0
    %138 = vmatpush1.msra.mxu0 0.0
    %139 = vmatprep.subr.mxu0 0.0
    %140 = vmatpush1.msra.mxu0 0.0
    %141 = vmatprep.subr.mxu0 0.0
    %142 = vmatpush1.msra.mxu0 0.0
    %143 = vmatprep.subr.mxu0 0.0
    %144 = vmatpush1.msra.mxu0 0.0
    %145 = vmatprep.subr.mxu0 0.0
    %146 = vmatpush1.msra.mxu0 0.0
    %147 = vmatprep.subr.mxu0 0.0
    %148 = vmatpush1.msra.mxu0 0.0
    %149 = vmatprep.subr.mxu0 0.0
    %150 = vmatpush1.msra.mxu0 0.0
    %151 = vmatprep.subr.mxu0 0.0
    %152 = vmatpush1.msra.mxu0 0.0
    %153 = vmatprep.subr.mxu0 0.0
    %154 = vmatpush1.msra.mxu0 0.0
    %155 = vmatprep.subr.mxu0 0.0
    %156 = vmatpush1.msra.mxu0 %v115
    %157 = vmatprep.subr.mxu0 0.0
    %158 = vmatpush1.msra.mxu0 %v114
    %159 = vmatprep.subr.mxu0 0.0
    %160 = vmatpush2.msra.mxu0 0.0
    %161 = vmatprep.subr.mxu0 0.0
    %162 = vmatpush2.msra.mxu0 0.0
    %163 = vmatprep.subr.mxu0 0.0
    %164 = vmatpush2.msra.mxu0 0.0
    %165 = vmatprep.subr.mxu0 0.0
    %166 = vmatpush2.msra.mxu0 0.0
    %167 = vmatprep.subr.mxu0 0.0
    %168 = vmatpush2.msra.mxu0 0.0
    %169 = vmatprep.subr.mxu0 0.0
    %170 = vmatpush2.msra.mxu0 0.0
    %171 = vmatprep.subr.mxu0 0.0
    %172 = vmatpush2.msra.mxu0 0.0
    %173 = vmatprep.subr.mxu0 0.0
    %174 = vmatpush2.msra.mxu0 0.0
    %175 = vmatprep.subr.mxu0 0.0
    %176 = vmatpush2.msra.mxu0 0.0
    %177 = vmatprep.subr.mxu0 0.0
    %178 = vmatpush2.msra.mxu0 0.0
    %179 = vmatprep.subr.mxu0 0.0
    %180 = vmatpush2.msra.mxu0 0.0
    %181 = vmatprep.subr.mxu0 0.0
    %182 = vmatpush2.msra.mxu0 0.0
    %183 = vmatprep.subr.mxu0 0.0
    %184 = vmatpush2.msra.mxu0 0.0
    %185 = vmatprep.subr.mxu0 0.0
    %186 = vmatpush2.msra.mxu0 0.0
    %187 = vmatprep.subr.mxu0 0.0
    %188 = vmatpush2.msra.mxu0 0.0
    %189 = vmatprep.subr.mxu0 0.0
    %190 = vmatpush2.msra.mxu0 0.0
    %191 = vmatprep.mubr.f32.mxu0 0.0
    %192 = vmatmul.mubr.f32.gmra.mxu0 %v125
    %v193 = vpop.f32.mrf.mxu0
    %v194 = vadd.f32 %v121, %v193
    %v195 = vpop.f32.mrf.mxu0
    %196 = vdwg.mxu0
    %vm197 = vcmp.ge.f32.partialorder %v194, 0.0
    %v198 = vmul.f32 %v194, 0.1
    %v199 = vsel %vm197, %v194, %v198
    %v200 = vld [vmem:[#allocation6] sm:$0xff]
    %v201 = vld [vmem:[#allocation6 + $0x8] sm:$0xff]
    %v202 = vld [vmem:[#allocation6 + $0x10] sm:$0xff]
    %v203 = vld [vmem:[#allocation6 + $0x18] sm:$0xff]
    %v204 = vld [vmem:[#allocation6 + $0x20] sm:$0xff]
    %v205 = vld [vmem:[#allocation6 + $0x28] sm:$0xff]
    %v206 = vld [vmem:[#allocation6 + $0x30] sm:$0xff]
    %v207 = vld [vmem:[#allocation6 + $0x38] sm:$0xff]
    %v208 = vld [vmem:[#allocation6 + $0x40] sm:$0xff]
    %v209 = vld [vmem:[#allocation6 + $0x48] sm:$0xff]
    %v210 = vld [vmem:[#allocation6 + $0x50] sm:$0xff]
    %v211 = vld [vmem:[#allocation6 + $0x58] sm:$0xff]
    %v212 = vld [vmem:[#allocation6 + $0x60] sm:$0xff]
    %v213 = vld [vmem:[#allocation6 + $0x68] sm:$0xff]
    %v214 = vld [vmem:[#allocation6 + $0x70] sm:$0xff]
    %v215 = vld [vmem:[#allocation6 + $0x78] sm:$0xff]
    %v216 = vld [vmem:[#allocation6 + $0x80] sm:$0xff]
    %v217 = vld [vmem:[#allocation6 + $0x88] sm:$0xff]
    %v218 = vld [vmem:[#allocation6 + $0x90] sm:$0xff]
    %v219 = vld [vmem:[#allocation6 + $0x98] sm:$0xff]
    %v220 = vld [vmem:[#allocation6 + $0xa0] sm:$0xff]
    %v221 = vld [vmem:[#allocation6 + $0xa8] sm:$0xff]
    %v222 = vld [vmem:[#allocation6 + $0xb0] sm:$0xff]
    %v223 = vld [vmem:[#allocation6 + $0xb8] sm:$0xff]
    %v224 = vld [vmem:[#allocation6 + $0xc0] sm:$0xff]
    %v225 = vld [vmem:[#allocation6 + $0xc8] sm:$0xff]
    %v226 = vld [vmem:[#allocation6 + $0xd0] sm:$0xff]
    %v227 = vld [vmem:[#allocation6 + $0xd8] sm:$0xff]
    %v228 = vld [vmem:[#allocation6 + $0xe0] sm:$0xff]
    %v229 = vld [vmem:[#allocation6 + $0xe8] sm:$0xff]
    %v230 = vld [vmem:[#allocation6 + $0xf0] sm:$0xff]
    %v231 = vld [vmem:[#allocation6 + $0xf8] sm:$0xff]
    %v232 = vld [vmem:[#allocation7] sm:$0x3]
    %v234 = vlaneseq
    %v235 = vshrl.u32 %v234, 7
    %v236 = vsub.s32 0, %v235
    %v237 = vrot.slane %v232, %v236
    %v238 = vlaneseq
    %v239 = vshrl.u32 %v238, 7
    %v240 = vsub.s32 1, %v239
    %v241 = vrot.slane %v232, %v240
    %244 = vmatprep.subr.mxu0 %v231
    %245 = vmatpush1.msra.mxu0 %v230
    %246 = vmatprep.subr.mxu0 %v229
    %247 = vmatpush1.msra.mxu0 %v228
    %248 = vmatprep.subr.mxu0 %v227
    %249 = vmatpush1.msra.mxu0 %v226
    %250 = vmatprep.subr.mxu0 %v225
    %251 = vmatpush1.msra.mxu0 %v224
    %252 = vmatprep.subr.mxu0 %v223
    %253 = vmatpush1.msra.mxu0 %v222
    %254 = vmatprep.subr.mxu0 %v221
    %255 = vmatpush1.msra.mxu0 %v220
    %256 = vmatprep.subr.mxu0 %v219
    %257 = vmatpush1.msra.mxu0 %v218
    %258 = vmatprep.subr.mxu0 %v217
    %259 = vmatpush1.msra.mxu0 %v216
    %260 = vmatprep.subr.mxu0 %v215
    %261 = vmatpush1.msra.mxu0 %v214
    %262 = vmatprep.subr.mxu0 %v213
    %263 = vmatpush1.msra.mxu0 %v212
    %264 = vmatprep.subr.mxu0 %v211
    %265 = vmatpush1.msra.mxu0 %v210
    %266 = vmatprep.subr.mxu0 %v209
    %267 = vmatpush1.msra.mxu0 %v208
    %268 = vmatprep.subr.mxu0 %v207
    %269 = vmatpush1.msra.mxu0 %v206
    %270 = vmatprep.subr.mxu0 %v205
    %271 = vmatpush1.msra.mxu0 %v204
    %272 = vmatprep.subr.mxu0 %v203
    %273 = vmatpush1.msra.mxu0 %v202
    %274 = vmatprep.subr.mxu0 %v201
    %275 = vmatpush1.msra.mxu0 %v200
    %276 = vmatprep.subr.mxu0 0.0
    %277 = vmatpush2.msra.mxu0 0.0
    %278 = vmatprep.subr.mxu0 0.0
    %279 = vmatpush2.msra.mxu0 0.0
    %280 = vmatprep.subr.mxu0 0.0
    %281 = vmatpush2.msra.mxu0 0.0
    %282 = vmatprep.subr.mxu0 0.0
    %283 = vmatpush2.msra.mxu0 0.0
    %284 = vmatprep.subr.mxu0 0.0
    %285 = vmatpush2.msra.mxu0 0.0
    %286 = vmatprep.subr.mxu0 0.0
    %287 = vmatpush2.msra.mxu0 0.0
    %288 = vmatprep.subr.mxu0 0.0
    %289 = vmatpush2.msra.mxu0 0.0
    %290 = vmatprep.subr.mxu0 0.0
    %291 = vmatpush2.msra.mxu0 0.0
    %292 = vmatprep.subr.mxu0 0.0
    %293 = vmatpush2.msra.mxu0 0.0
    %294 = vmatprep.subr.mxu0 0.0
    %295 = vmatpush2.msra.mxu0 0.0
    %296 = vmatprep.subr.mxu0 0.0
    %297 = vmatpush2.msra.mxu0 0.0
    %298 = vmatprep.subr.mxu0 0.0
    %299 = vmatpush2.msra.mxu0 0.0
    %300 = vmatprep.subr.mxu0 0.0
    %301 = vmatpush2.msra.mxu0 0.0
    %302 = vmatprep.subr.mxu0 0.0
    %303 = vmatpush2.msra.mxu0 0.0
    %304 = vmatprep.subr.mxu0 0.0
    %305 = vmatpush2.msra.mxu0 0.0
    %306 = vmatprep.subr.mxu0 0.0
    %307 = vmatpush2.msra.mxu0 0.0
    %308 = vmatprep.mubr.f32.mxu0 0.0
    %309 = vmatmul.mubr.f32.gmra.mxu0 %v199
    %v310 = vpop.f32.mrf.mxu0
    %v311 = vadd.f32 %v237, %v310
    %v312 = vpop.f32.mrf.mxu0
    %v313 = vadd.f32 %v241, %v312
    %314 = vdwg.mxu0
    %vm315 = vcmp.ge.f32.partialorder %v311, 0.0
    %vm316 = vcmp.ge.f32.partialorder %v313, 0.0
    %v317 = vmul.f32 %v311, 0.01
    %v318 = vmul.f32 %v313, 0.01
    %v319 = vsel %vm315, %v311, %v317
    %v320 = vsel %vm316, %v313, %v318
    %v321 = vld [vmem:[#allocation9] sm:$0xff]
    %v322 = vld [vmem:[#allocation9 + $0x8] sm:$0xff]
    %v323 = vld [vmem:[#allocation9 + $0x10] sm:$0xff]
    %v324 = vld [vmem:[#allocation9 + $0x18] sm:$0xff]
    %v325 = vld [vmem:[#allocation9 + $0x20] sm:$0xff]
    %v326 = vld [vmem:[#allocation9 + $0x28] sm:$0xff]
    %v327 = vld [vmem:[#allocation9 + $0x30] sm:$0xff]
    %v328 = vld [vmem:[#allocation9 + $0x38] sm:$0xff]
    %v329 = vld [vmem:[#allocation9 + $0x40] sm:$0xff]
    %v330 = vld [vmem:[#allocation9 + $0x48] sm:$0xff]
    %v331 = vld [vmem:[#allocation9 + $0x50] sm:$0xff]
    %v332 = vld [vmem:[#allocation9 + $0x58] sm:$0xff]
    %v333 = vld [vmem:[#allocation9 + $0x60] sm:$0xff]
    %v334 = vld [vmem:[#allocation9 + $0x68] sm:$0xff]
    %v335 = vld [vmem:[#allocation9 + $0x70] sm:$0xff]
    %v336 = vld [vmem:[#allocation9 + $0x78] sm:$0xff]
    %v337 = vld [vmem:[#allocation9 + $0x80] sm:$0xff]
    %v338 = vld [vmem:[#allocation9 + $0x88] sm:$0xff]
    %v339 = vld [vmem:[#allocation9 + $0x90] sm:$0xff]
    %v340 = vld [vmem:[#allocation9 + $0x98] sm:$0xff]
    %v341 = vld [vmem:[#allocation9 + $0xa0] sm:$0xff]
    %v342 = vld [vmem:[#allocation9 + $0xa8] sm:$0xff]
    %v343 = vld [vmem:[#allocation9 + $0xb0] sm:$0xff]
    %v344 = vld [vmem:[#allocation9 + $0xb8] sm:$0xff]
    %v345 = vld [vmem:[#allocation9 + $0xc0] sm:$0xff]
    %v346 = vld [vmem:[#allocation9 + $0xc8] sm:$0xff]
    %v347 = vld [vmem:[#allocation9 + $0xd0] sm:$0xff]
    %v348 = vld [vmem:[#allocation9 + $0xd8] sm:$0xff]
    %v349 = vld [vmem:[#allocation9 + $0xe0] sm:$0xff]
    %v350 = vld [vmem:[#allocation9 + $0xe8] sm:$0xff]
    %v351 = vld [vmem:[#allocation9 + $0xf0] sm:$0xff]
    %v352 = vld [vmem:[#allocation9 + $0xf8] sm:$0xff]
    %v353 = vld [vmem:[#allocation9 + $0x100] sm:$0xff]
    %v354 = vld [vmem:[#allocation9 + $0x108] sm:$0xff]
    %v355 = vld [vmem:[#allocation9 + $0x110] sm:$0xff]
    %v356 = vld [vmem:[#allocation9 + $0x118] sm:$0xff]
    %v357 = vld [vmem:[#allocation9 + $0x120] sm:$0xff]
    %v358 = vld [vmem:[#allocation9 + $0x128] sm:$0xff]
    %v359 = vld [vmem:[#allocation9 + $0x130] sm:$0xff]
    %v360 = vld [vmem:[#allocation9 + $0x138] sm:$0xff]
    %v361 = vld [vmem:[#allocation9 + $0x140] sm:$0xff]
    %v362 = vld [vmem:[#allocation9 + $0x148] sm:$0xff]
    %v363 = vld [vmem:[#allocation9 + $0x150] sm:$0xff]
    %v364 = vld [vmem:[#allocation9 + $0x158] sm:$0xff]
    %v365 = vld [vmem:[#allocation9 + $0x160] sm:$0xff]
    %v366 = vld [vmem:[#allocation9 + $0x168] sm:$0xff]
    %v367 = vld [vmem:[#allocation9 + $0x170] sm:$0xff]
    %v368 = vld [vmem:[#allocation9 + $0x178] sm:$0xff]
    %v369 = vld [vmem:[#allocation9 + $0x180] sm:$0xff]
    %v370 = vld [vmem:[#allocation9 + $0x188] sm:$0xff]
    %v371 = vld [vmem:[#allocation9 + $0x190] sm:$0xff]
    %v372 = vld [vmem:[#allocation9 + $0x198] sm:$0xff]
    %v373 = vld [vmem:[#allocation9 + $0x1a0] sm:$0xff]
    %v374 = vld [vmem:[#allocation9 + $0x1a8] sm:$0xff]
    %v375 = vld [vmem:[#allocation9 + $0x1b0] sm:$0xff]
    %v376 = vld [vmem:[#allocation9 + $0x1b8] sm:$0xff]
    %v377 = vld [vmem:[#allocation9 + $0x1c0] sm:$0xff]
    %v378 = vld [vmem:[#allocation9 + $0x1c8] sm:$0xff]
    %v379 = vld [vmem:[#allocation9 + $0x1d0] sm:$0xff]
    %v380 = vld [vmem:[#allocation9 + $0x1d8] sm:$0xff]
    %v381 = vld [vmem:[#allocation9 + $0x1e0] sm:$0xff]
    %v382 = vld [vmem:[#allocation9 + $0x1e8] sm:$0xff]
    %v383 = vld [vmem:[#allocation9 + $0x1f0] sm:$0xff]
    %v384 = vld [vmem:[#allocation9 + $0x1f8] sm:$0xff]
    %v385 = vld [vmem:[#allocation9 + $0x200] sm:$0xff]
    %v386 = vld [vmem:[#allocation9 + $0x208] sm:$0xff]
    %v387 = vld [vmem:[#allocation9 + $0x210] sm:$0xff]
    %v388 = vld [vmem:[#allocation9 + $0x218] sm:$0xff]
    %v389 = vld [vmem:[#allocation9 + $0x220] sm:$0xff]
    %v390 = vld [vmem:[#allocation9 + $0x228] sm:$0xff]
    %v391 = vld [vmem:[#allocation9 + $0x230] sm:$0xff]
    %v392 = vld [vmem:[#allocation9 + $0x238] sm:$0xff]
    %v393 = vld [vmem:[#allocation9 + $0x240] sm:$0xff]
    %v394 = vld [vmem:[#allocation9 + $0x248] sm:$0xff]
    %v395 = vld [vmem:[#allocation9 + $0x250] sm:$0xff]
    %v396 = vld [vmem:[#allocation9 + $0x258] sm:$0xff]
    %v397 = vld [vmem:[#allocation9 + $0x260] sm:$0xff]
    %v398 = vld [vmem:[#allocation9 + $0x268] sm:$0xff]
    %v399 = vld [vmem:[#allocation9 + $0x270] sm:$0xff]
    %v400 = vld [vmem:[#allocation9 + $0x278] sm:$0xff]
    %v401 = vld [vmem:[#allocation9 + $0x280] sm:$0xff]
    %v402 = vld [vmem:[#allocation9 + $0x288] sm:$0xff]
    %v403 = vld [vmem:[#allocation9 + $0x290] sm:$0xff]
    %v404 = vld [vmem:[#allocation9 + $0x298] sm:$0xff]
    %v405 = vld [vmem:[#allocation9 + $0x2a0] sm:$0xff]
    %v406 = vld [vmem:[#allocation9 + $0x2a8] sm:$0xff]
    %v407 = vld [vmem:[#allocation9 + $0x2b0] sm:$0xff]
    %v408 = vld [vmem:[#allocation9 + $0x2b8] sm:$0xff]
    %v409 = vld [vmem:[#allocation9 + $0x2c0] sm:$0xff]
    %v410 = vld [vmem:[#allocation9 + $0x2c8] sm:$0xff]
    %v411 = vld [vmem:[#allocation9 + $0x2d0] sm:$0xff]
    %v412 = vld [vmem:[#allocation9 + $0x2d8] sm:$0xff]
    %v413 = vld [vmem:[#allocation9 + $0x2e0] sm:$0xff]
    %v414 = vld [vmem:[#allocation9 + $0x2e8] sm:$0xff]
    %v415 = vld [vmem:[#allocation9 + $0x2f0] sm:$0xff]
    %v416 = vld [vmem:[#allocation9 + $0x2f8] sm:$0xff]
    %v417 = vld [vmem:[#allocation9 + $0x300] sm:$0xff]
    %v418 = vld [vmem:[#allocation9 + $0x308] sm:$0xff]
    %v419 = vld [vmem:[#allocation9 + $0x310] sm:$0xff]
    %v420 = vld [vmem:[#allocation9 + $0x318] sm:$0xff]
    %v421 = vld [vmem:[#allocation9 + $0x320] sm:$0xff]
    %v422 = vld [vmem:[#allocation9 + $0x328] sm:$0xff]
    %v423 = vld [vmem:[#allocation9 + $0x330] sm:$0xff]
    %v424 = vld [vmem:[#allocation9 + $0x338] sm:$0xff]
    %v425 = vld [vmem:[#allocation9 + $0x340] sm:$0xff]
    %v426 = vld [vmem:[#allocation9 + $0x348] sm:$0xff]
    %v427 = vld [vmem:[#allocation9 + $0x350] sm:$0xff]
    %v428 = vld [vmem:[#allocation9 + $0x358] sm:$0xff]
    %v429 = vld [vmem:[#allocation9 + $0x360] sm:$0xff]
    %v430 = vld [vmem:[#allocation9 + $0x368] sm:$0xff]
    %v431 = vld [vmem:[#allocation9 + $0x370] sm:$0xff]
    %v432 = vld [vmem:[#allocation9 + $0x378] sm:$0xff]
    %v433 = vld [vmem:[#allocation9 + $0x380] sm:$0xff]
    %v434 = vld [vmem:[#allocation9 + $0x388] sm:$0xff]
    %v435 = vld [vmem:[#allocation9 + $0x390] sm:$0xff]
    %v436 = vld [vmem:[#allocation9 + $0x398] sm:$0xff]
    %v437 = vld [vmem:[#allocation9 + $0x3a0] sm:$0xff]
    %v438 = vld [vmem:[#allocation9 + $0x3a8] sm:$0xff]
    %v439 = vld [vmem:[#allocation9 + $0x3b0] sm:$0xff]
    %v440 = vld [vmem:[#allocation9 + $0x3b8] sm:$0xff]
    %v441 = vld [vmem:[#allocation9 + $0x3c0] sm:$0xff]
    %v442 = vld [vmem:[#allocation9 + $0x3c8] sm:$0xff]
    %v443 = vld [vmem:[#allocation9 + $0x3d0] sm:$0xff]
    %v444 = vld [vmem:[#allocation9 + $0x3d8] sm:$0xff]
    %v445 = vld [vmem:[#allocation9 + $0x3e0] sm:$0xff]
    %v446 = vld [vmem:[#allocation9 + $0x3e8] sm:$0xff]
    %v447 = vld [vmem:[#allocation9 + $0x3f0] sm:$0xff]
    %v448 = vld [vmem:[#allocation9 + $0x3f8] sm:$0xff]
    %v449 = vld [vmem:[%s6] sm:$0xf]
    %v451 = vlaneseq
    %v452 = vshrl.u32 %v451, 7
    %v453 = vsub.s32 0, %v452
    %v454 = vrot.slane %v449, %v453
    %v455 = vlaneseq
    %v456 = vshrl.u32 %v455, 7
    %v457 = vsub.s32 1, %v456
    %v458 = vrot.slane %v449, %v457
    %v459 = vlaneseq
    %v460 = vshrl.u32 %v459, 7
    %v461 = vsub.s32 2, %v460
    %v462 = vrot.slane %v449, %v461
    %v463 = vlaneseq
    %v464 = vshrl.u32 %v463, 7
    %v465 = vsub.s32 3, %v464
    %v466 = vrot.slane %v449, %v465
    %471 = vmatprep.subr.mxu0 %v382
    %472 = vmatpush1.msra.mxu0 %v381
    %473 = vmatprep.subr.mxu0 %v378
    %474 = vmatpush1.msra.mxu0 %v377
    %475 = vmatprep.subr.mxu0 %v374
    %476 = vmatpush1.msra.mxu0 %v373
    %477 = vmatprep.subr.mxu0 %v370
    %478 = vmatpush1.msra.mxu0 %v369
    %479 = vmatprep.subr.mxu0 %v366
    %480 = vmatpush1.msra.mxu0 %v365
    %481 = vmatprep.subr.mxu0 %v362
    %482 = vmatpush1.msra.mxu0 %v361
    %483 = vmatprep.subr.mxu0 %v358
    %484 = vmatpush1.msra.mxu0 %v357
    %485 = vmatprep.subr.mxu0 %v354
    %486 = vmatpush1.msra.mxu0 %v353
    %487 = vmatprep.subr.mxu0 %v350
    %488 = vmatpush1.msra.mxu0 %v349
    %489 = vmatprep.subr.mxu0 %v346
    %490 = vmatpush1.msra.mxu0 %v345
    %491 = vmatprep.subr.mxu0 %v342
    %492 = vmatpush1.msra.mxu0 %v341
    %493 = vmatprep.subr.mxu0 %v338
    %494 = vmatpush1.msra.mxu0 %v337
    %495 = vmatprep.subr.mxu0 %v334
    %496 = vmatpush1.msra.mxu0 %v333
    %497 = vmatprep.subr.mxu0 %v330
    %498 = vmatpush1.msra.mxu0 %v329
    %499 = vmatprep.subr.mxu0 %v326
    %500 = vmatpush1.msra.mxu0 %v325
    %501 = vmatprep.subr.mxu0 %v322
    %502 = vmatpush1.msra.mxu0 %v321
    %503 = vmatprep.subr.mxu0 %v446
    %504 = vmatpush2.msra.mxu0 %v445
    %505 = vmatprep.subr.mxu0 %v442
    %506 = vmatpush2.msra.mxu0 %v441
    %507 = vmatprep.subr.mxu0 %v438
    %508 = vmatpush2.msra.mxu0 %v437
    %509 = vmatprep.subr.mxu0 %v434
    %510 = vmatpush2.msra.mxu0 %v433
    %511 = vmatprep.subr.mxu0 %v430
    %512 = vmatpush2.msra.mxu0 %v429
    %513 = vmatprep.subr.mxu0 %v426
    %514 = vmatpush2.msra.mxu0 %v425
    %515 = vmatprep.subr.mxu0 %v422
    %516 = vmatpush2.msra.mxu0 %v421
    %517 = vmatprep.subr.mxu0 %v418
    %518 = vmatpush2.msra.mxu0 %v417
    %519 = vmatprep.subr.mxu0 %v414
    %520 = vmatpush2.msra.mxu0 %v413
    %521 = vmatprep.subr.mxu0 %v410
    %522 = vmatpush2.msra.mxu0 %v409
    %523 = vmatprep.subr.mxu0 %v406
    %524 = vmatpush2.msra.mxu0 %v405
    %525 = vmatprep.subr.mxu0 %v402
    %526 = vmatpush2.msra.mxu0 %v401
    %527 = vmatprep.subr.mxu0 %v398
    %528 = vmatpush2.msra.mxu0 %v397
    %529 = vmatprep.subr.mxu0 %v394
    %530 = vmatpush2.msra.mxu0 %v393
    %531 = vmatprep.subr.mxu0 %v390
    %532 = vmatpush2.msra.mxu0 %v389
    %533 = vmatprep.subr.mxu0 %v386
    %534 = vmatpush2.msra.mxu0 %v385
    %535 = vmatprep.mubr.f32.mxu0 %v320
    %536 = vmatmul.mubr.f32.gmra.mxu0 %v319
    %v537 = vpop.f32.mrf.mxu0
    %v538 = vadd.f32 %v454, %v537
    %v539 = vpop.f32.mrf.mxu0
    %v540 = vadd.f32 %v458, %v539
    %541 = vdwg.mxu0
    %542 = vmatprep.subr.mxu0 %v384
    %543 = vmatpush1.msra.mxu0 %v383
    %544 = vmatprep.subr.mxu0 %v380
    %545 = vmatpush1.msra.mxu0 %v379
    %546 = vmatprep.subr.mxu0 %v376
    %547 = vmatpush1.msra.mxu0 %v375
    %548 = vmatprep.subr.mxu0 %v372
    %549 = vmatpush1.msra.mxu0 %v371
    %550 = vmatprep.subr.mxu0 %v368
    %551 = vmatpush1.msra.mxu0 %v367
    %552 = vmatprep.subr.mxu0 %v364
    %553 = vmatpush1.msra.mxu0 %v363
    %554 = vmatprep.subr.mxu0 %v360
    %555 = vmatpush1.msra.mxu0 %v359
    %556 = vmatprep.subr.mxu0 %v356
    %557 = vmatpush1.msra.mxu0 %v355
    %558 = vmatprep.subr.mxu0 %v352
    %559 = vmatpush1.msra.mxu0 %v351
    %560 = vmatprep.subr.mxu0 %v348
    %561 = vmatpush1.msra.mxu0 %v347
    %562 = vmatprep.subr.mxu0 %v344
    %563 = vmatpush1.msra.mxu0 %v343
    %564 = vmatprep.subr.mxu0 %v340
    %565 = vmatpush1.msra.mxu0 %v339
    %566 = vmatprep.subr.mxu0 %v336
    %567 = vmatpush1.msra.mxu0 %v335
    %568 = vmatprep.subr.mxu0 %v332
    %569 = vmatpush1.msra.mxu0 %v331
    %570 = vmatprep.subr.mxu0 %v328
    %571 = vmatpush1.msra.mxu0 %v327
    %572 = vmatprep.subr.mxu0 %v324
    %573 = vmatpush1.msra.mxu0 %v323
    %574 = vmatprep.subr.mxu0 %v448
    %575 = vmatpush2.msra.mxu0 %v447
    %576 = vmatprep.subr.mxu0 %v444
    %577 = vmatpush2.msra.mxu0 %v443
    %578 = vmatprep.subr.mxu0 %v440
    %579 = vmatpush2.msra.mxu0 %v439
    %580 = vmatprep.subr.mxu0 %v436
    %581 = vmatpush2.msra.mxu0 %v435
    %582 = vmatprep.subr.mxu0 %v432
    %583 = vmatpush2.msra.mxu0 %v431
    %584 = vmatprep.subr.mxu0 %v428
    %585 = vmatpush2.msra.mxu0 %v427
    %586 = vmatprep.subr.mxu0 %v424
    %587 = vmatpush2.msra.mxu0 %v423
    %588 = vmatprep.subr.mxu0 %v420
    %589 = vmatpush2.msra.mxu0 %v419
    %590 = vmatprep.subr.mxu0 %v416
    %591 = vmatpush2.msra.mxu0 %v415
    %592 = vmatprep.subr.mxu0 %v412
    %593 = vmatpush2.msra.mxu0 %v411
    %594 = vmatprep.subr.mxu0 %v408
    %595 = vmatpush2.msra.mxu0 %v407
    %596 = vmatprep.subr.mxu0 %v404
    %597 = vmatpush2.msra.mxu0 %v403
    %598 = vmatprep.subr.mxu0 %v400
    %599 = vmatpush2.msra.mxu0 %v399
    %600 = vmatprep.subr.mxu0 %v396
    %601 = vmatpush2.msra.mxu0 %v395
    %602 = vmatprep.subr.mxu0 %v392
    %603 = vmatpush2.msra.mxu0 %v391
    %604 = vmatprep.subr.mxu0 %v388
    %605 = vmatpush2.msra.mxu0 %v387
    %606 = vmatprep.mubr.f32.mxu0 %v320
    %607 = vmatmul.mubr.f32.gmra.mxu0 %v319
    %v608 = vpop.f32.mrf.mxu0
    %v609 = vadd.f32 %v462, %v608
    %v610 = vpop.f32.mrf.mxu0
    %v611 = vadd.f32 %v466, %v610
    %612 = vdwg.mxu0
    %vm613 = vcmp.ge.f32.partialorder %v538, 0.0
    %vm614 = vcmp.ge.f32.partialorder %v540, 0.0
    %vm615 = vcmp.ge.f32.partialorder %v609, 0.0
    %vm616 = vcmp.ge.f32.partialorder %v611, 0.0
    %v617 = vmul.f32 %v538, 0.01
    %v618 = vmul.f32 %v540, 0.01
    %v619 = vmul.f32 %v609, 0.01
    %v620 = vmul.f32 %v611, 0.01
    %v621 = vsel %vm613, %v538, %v617
    %v622 = vsel %vm614, %v540, %v618
    %v623 = vsel %vm615, %v609, %v619
    %v624 = vsel %vm616, %v611, %v620
    %v625 = vld [vmem:[#allocation10] sm:$0xff]
    %v626 = vld [vmem:[#allocation10 + $0x8] sm:$0xff]
    %v627 = vld [vmem:[#allocation10 + $0x10] sm:$0xff]
    %v628 = vld [vmem:[#allocation10 + $0x18] sm:$0xff]
    %v629 = vld [vmem:[#allocation10 + $0x20] sm:$0xff]
    %v630 = vld [vmem:[#allocation10 + $0x28] sm:$0xff]
    %v631 = vld [vmem:[#allocation10 + $0x30] sm:$0xff]
    %v632 = vld [vmem:[#allocation10 + $0x38] sm:$0xff]
    %v633 = vld [vmem:[#allocation10 + $0x40] sm:$0xff]
    %v634 = vld [vmem:[#allocation10 + $0x48] sm:$0xff]
    %v635 = vld [vmem:[#allocation10 + $0x50] sm:$0xff]
    %v636 = vld [vmem:[#allocation10 + $0x58] sm:$0xff]
    %v637 = vld [vmem:[#allocation10 + $0x60] sm:$0xff]
    %v638 = vld [vmem:[#allocation10 + $0x68] sm:$0xff]
    %v639 = vld [vmem:[#allocation10 + $0x70] sm:$0xff]
    %v640 = vld [vmem:[#allocation10 + $0x78] sm:$0xff]
    %v641 = vld [vmem:[#allocation10 + $0x80] sm:$0xff]
    %v642 = vld [vmem:[#allocation10 + $0x88] sm:$0xff]
    %v643 = vld [vmem:[#allocation10 + $0x90] sm:$0xff]
    %v644 = vld [vmem:[#allocation10 + $0x98] sm:$0xff]
    %v645 = vld [vmem:[#allocation10 + $0xa0] sm:$0xff]
    %v646 = vld [vmem:[#allocation10 + $0xa8] sm:$0xff]
    %v647 = vld [vmem:[#allocation10 + $0xb0] sm:$0xff]
    %v648 = vld [vmem:[#allocation10 + $0xb8] sm:$0xff]
    %v649 = vld [vmem:[#allocation10 + $0xc0] sm:$0xff]
    %v650 = vld [vmem:[#allocation10 + $0xc8] sm:$0xff]
    %v651 = vld [vmem:[#allocation10 + $0xd0] sm:$0xff]
    %v652 = vld [vmem:[#allocation10 + $0xd8] sm:$0xff]
    %v653 = vld [vmem:[#allocation10 + $0xe0] sm:$0xff]
    %v654 = vld [vmem:[#allocation10 + $0xe8] sm:$0xff]
    %v655 = vld [vmem:[#allocation10 + $0xf0] sm:$0xff]
    %v656 = vld [vmem:[#allocation10 + $0xf8] sm:$0xff]
    %v657 = vld [vmem:[#allocation10 + $0x100] sm:$0xff]
    %v658 = vld [vmem:[#allocation10 + $0x108] sm:$0xff]
    %v659 = vld [vmem:[#allocation10 + $0x110] sm:$0xff]
    %v660 = vld [vmem:[#allocation10 + $0x118] sm:$0xff]
    %v661 = vld [vmem:[#allocation10 + $0x120] sm:$0xff]
    %v662 = vld [vmem:[#allocation10 + $0x128] sm:$0xff]
    %v663 = vld [vmem:[#allocation10 + $0x130] sm:$0xff]
    %v664 = vld [vmem:[#allocation10 + $0x138] sm:$0xff]
    %v665 = vld [vmem:[#allocation10 + $0x140] sm:$0xff]
    %v666 = vld [vmem:[#allocation10 + $0x148] sm:$0xff]
    %v667 = vld [vmem:[#allocation10 + $0x150] sm:$0xff]
    %v668 = vld [vmem:[#allocation10 + $0x158] sm:$0xff]
    %v669 = vld [vmem:[#allocation10 + $0x160] sm:$0xff]
    %v670 = vld [vmem:[#allocation10 + $0x168] sm:$0xff]
    %v671 = vld [vmem:[#allocation10 + $0x170] sm:$0xff]
    %v672 = vld [vmem:[#allocation10 + $0x178] sm:$0xff]
    %v673 = vld [vmem:[#allocation10 + $0x180] sm:$0xff]
    %v674 = vld [vmem:[#allocation10 + $0x188] sm:$0xff]
    %v675 = vld [vmem:[#allocation10 + $0x190] sm:$0xff]
    %v676 = vld [vmem:[#allocation10 + $0x198] sm:$0xff]
    %v677 = vld [vmem:[#allocation10 + $0x1a0] sm:$0xff]
    %v678 = vld [vmem:[#allocation10 + $0x1a8] sm:$0xff]
    %v679 = vld [vmem:[#allocation10 + $0x1b0] sm:$0xff]
    %v680 = vld [vmem:[#allocation10 + $0x1b8] sm:$0xff]
    %v681 = vld [vmem:[#allocation10 + $0x1c0] sm:$0xff]
    %v682 = vld [vmem:[#allocation10 + $0x1c8] sm:$0xff]
    %v683 = vld [vmem:[#allocation10 + $0x1d0] sm:$0xff]
    %v684 = vld [vmem:[#allocation10 + $0x1d8] sm:$0xff]
    %v685 = vld [vmem:[#allocation10 + $0x1e0] sm:$0xff]
    %v686 = vld [vmem:[#allocation10 + $0x1e8] sm:$0xff]
    %v687 = vld [vmem:[#allocation10 + $0x1f0] sm:$0xff]
    %v688 = vld [vmem:[#allocation10 + $0x1f8] sm:$0xff]
    %689 = vmatprep.subr.mxu0 0.0
    %690 = vmatpush1.msra.mxu0 %v640
    %691 = vmatprep.subr.mxu0 0.0
    %692 = vmatpush1.msra.mxu0 %v639
    %693 = vmatprep.subr.mxu0 0.0
    %694 = vmatpush1.msra.mxu0 %v638
    %695 = vmatprep.subr.mxu0 0.0
    %696 = vmatpush1.msra.mxu0 %v637
    %697 = vmatprep.subr.mxu0 0.0
    %698 = vmatpush1.msra.mxu0 %v636
    %699 = vmatprep.subr.mxu0 0.0
    %700 = vmatpush1.msra.mxu0 %v635
    %701 = vmatprep.subr.mxu0 0.0
    %702 = vmatpush1.msra.mxu0 %v634
    %703 = vmatprep.subr.mxu0 0.0
    %704 = vmatpush1.msra.mxu0 %v633
    %705 = vmatprep.subr.mxu0 0.0
    %706 = vmatpush1.msra.mxu0 %v632
    %707 = vmatprep.subr.mxu0 0.0
    %708 = vmatpush1.msra.mxu0 %v631
    %709 = vmatprep.subr.mxu0 0.0
    %710 = vmatpush1.msra.mxu0 %v630
    %711 = vmatprep.subr.mxu0 0.0
    %712 = vmatpush1.msra.mxu0 %v629
    %713 = vmatprep.subr.mxu0 0.0
    %714 = vmatpush1.msra.mxu0 %v628
    %715 = vmatprep.subr.mxu0 0.0
    %716 = vmatpush1.msra.mxu0 %v627
    %717 = vmatprep.subr.mxu0 0.0
    %718 = vmatpush1.msra.mxu0 %v626
    %719 = vmatprep.subr.mxu0 0.0
    %720 = vmatpush1.msra.mxu0 %v625
    %721 = vmatprep.subr.mxu0 0.0
    %722 = vmatpush2.msra.mxu0 %v656
    %723 = vmatprep.subr.mxu0 0.0
    %724 = vmatpush2.msra.mxu0 %v655
    %725 = vmatprep.subr.mxu0 0.0
    %726 = vmatpush2.msra.mxu0 %v654
    %727 = vmatprep.subr.mxu0 0.0
    %728 = vmatpush2.msra.mxu0 %v653
    %729 = vmatprep.subr.mxu0 0.0
    %730 = vmatpush2.msra.mxu0 %v652
    %731 = vmatprep.subr.mxu0 0.0
    %732 = vmatpush2.msra.mxu0 %v651
    %733 = vmatprep.subr.mxu0 0.0
    %734 = vmatpush2.msra.mxu0 %v650
    %735 = vmatprep.subr.mxu0 0.0
    %736 = vmatpush2.msra.mxu0 %v649
    %737 = vmatprep.subr.mxu0 0.0
    %738 = vmatpush2.msra.mxu0 %v648
    %739 = vmatprep.subr.mxu0 0.0
    %740 = vmatpush2.msra.mxu0 %v647
    %741 = vmatprep.subr.mxu0 0.0
    %742 = vmatpush2.msra.mxu0 %v646
    %743 = vmatprep.subr.mxu0 0.0
    %744 = vmatpush2.msra.mxu0 %v645
    %745 = vmatprep.subr.mxu0 0.0
    %746 = vmatpush2.msra.mxu0 %v644
    %747 = vmatprep.subr.mxu0 0.0
    %748 = vmatpush2.msra.mxu0 %v643
    %749 = vmatprep.subr.mxu0 0.0
    %750 = vmatpush2.msra.mxu0 %v642
    %751 = vmatprep.subr.mxu0 0.0
    %752 = vmatpush2.msra.mxu0 %v641
    %753 = vmatprep.mubr.f32.mxu0 %v622
    %754 = vmatmul.mubr.f32.gmra.mxu0 %v621
    %v755 = vpop.f32.mrf.mxu0
    %v756 = vadd.f32 0.0, %v755
    %v757 = vpop.f32.mrf.mxu0
    %758 = vdwg.mxu0
    %759 = vmatprep.subr.mxu0 0.0
    %760 = vmatpush1.msra.mxu0 %v672
    %761 = vmatprep.subr.mxu0 0.0
    %762 = vmatpush1.msra.mxu0 %v671
    %763 = vmatprep.subr.mxu0 0.0
    %764 = vmatpush1.msra.mxu0 %v670
    %765 = vmatprep.subr.mxu0 0.0
    %766 = vmatpush1.msra.mxu0 %v669
    %767 = vmatprep.subr.mxu0 0.0
    %768 = vmatpush1.msra.mxu0 %v668
    %769 = vmatprep.subr.mxu0 0.0
    %770 = vmatpush1.msra.mxu0 %v667
    %771 = vmatprep.subr.mxu0 0.0
    %772 = vmatpush1.msra.mxu0 %v666
    %773 = vmatprep.subr.mxu0 0.0
    %774 = vmatpush1.msra.mxu0 %v665
    %775 = vmatprep.subr.mxu0 0.0
    %776 = vmatpush1.msra.mxu0 %v664
    %777 = vmatprep.subr.mxu0 0.0
    %778 = vmatpush1.msra.mxu0 %v663
    %779 = vmatprep.subr.mxu0 0.0
    %780 = vmatpush1.msra.mxu0 %v662
    %781 = vmatprep.subr.mxu0 0.0
    %782 = vmatpush1.msra.mxu0 %v661
    %783 = vmatprep.subr.mxu0 0.0
    %784 = vmatpush1.msra.mxu0 %v660
    %785 = vmatprep.subr.mxu0 0.0
    %786 = vmatpush1.msra.mxu0 %v659
    %787 = vmatprep.subr.mxu0 0.0
    %788 = vmatpush1.msra.mxu0 %v658
    %789 = vmatprep.subr.mxu0 0.0
    %790 = vmatpush1.msra.mxu0 %v657
    %791 = vmatprep.subr.mxu0 0.0
    %792 = vmatpush2.msra.mxu0 %v688
    %793 = vmatprep.subr.mxu0 0.0
    %794 = vmatpush2.msra.mxu0 %v687
    %795 = vmatprep.subr.mxu0 0.0
    %796 = vmatpush2.msra.mxu0 %v686
    %797 = vmatprep.subr.mxu0 0.0
    %798 = vmatpush2.msra.mxu0 %v685
    %799 = vmatprep.subr.mxu0 0.0
    %800 = vmatpush2.msra.mxu0 %v684
    %801 = vmatprep.subr.mxu0 0.0
    %802 = vmatpush2.msra.mxu0 %v683
    %803 = vmatprep.subr.mxu0 0.0
    %804 = vmatpush2.msra.mxu0 %v682
    %805 = vmatprep.subr.mxu0 0.0
    %806 = vmatpush2.msra.mxu0 %v681
    %807 = vmatprep.subr.mxu0 0.0
    %808 = vmatpush2.msra.mxu0 %v680
    %809 = vmatprep.subr.mxu0 0.0
    %810 = vmatpush2.msra.mxu0 %v679
    %811 = vmatprep.subr.mxu0 0.0
    %812 = vmatpush2.msra.mxu0 %v678
    %813 = vmatprep.subr.mxu0 0.0
    %814 = vmatpush2.msra.mxu0 %v677
    %815 = vmatprep.subr.mxu0 0.0
    %816 = vmatpush2.msra.mxu0 %v676
    %817 = vmatprep.subr.mxu0 0.0
    %818 = vmatpush2.msra.mxu0 %v675
    %819 = vmatprep.subr.mxu0 0.0
    %820 = vmatpush2.msra.mxu0 %v674
    %821 = vmatprep.subr.mxu0 0.0
    %822 = vmatpush2.msra.mxu0 %v673
    %823 = vmatprep.mubr.f32.mxu0 %v624
    %824 = vmatmul.mubr.f32.gmra.mxu0 %v623
    %v825 = vpop.f32.mrf.mxu0
    %v826 = vadd.f32 %v756, %v825
    %v827 = vpop.f32.mrf.mxu0
    %828 = vdwg.mxu0
    %v829 = vld [vmem:[%s9] sm:$0x1]
    %v831 = vlaneseq
    %v832 = vshrl.u32 %v831, 7
    %v833 = vsub.s32 0, %v832
    %v834 = vrot.slane %v829, %v833
    %v836 = vmul.f32 %v826, %v834
    %v837 = vld [vmem:[%s8] sm:$0x1]
    %v839 = vlaneseq
    %v840 = vshrl.u32 %v839, 7
    %v841 = vsub.s32 0, %v840
    %v842 = vrot.slane %v837, %v841
    %v844 = vadd.f32 %v836, %v842
    %845 = vst [vmem:[%s10] sm:$0xff] %v844
    // Predicated region
    $region66: #{generator_forward.1} parent=1 // pred_check
      _
    $region67: #{generator_forward.1} parent=1 // pred_check_branch
      %847 = sbr.rel (0) target = $region69
    $region68: #{generator_forward.1} parent=1 // pred_region
      _
    $region69: #{generator_forward.1} parent=1 // pred_fallthru
      _
    // Predicated region
    $region70: #{generator_forward.1} parent=1 // pred_check
      _
    $region71: #{generator_forward.1} parent=1 // pred_check_branch
      %849 = sbr.rel (0) target = $region73
    $region72: #{generator_forward.1} parent=1 // pred_region
      _
    $region73: #{generator_forward.1} parent=1 // pred_fallthru
      _
    %850 = vsyncpa [#allocation3], 1
    %851 = vsyncpa [#allocation5], 1
    %852 = vsyncpa [#allocation8], 1
    %853 = vsyncpa [#allocation11], 1

</llo_original>
